<compile_context>
chip_gen: v7x
topology: tpu7x:2x2x1
jax: 0.10.0
libtpu: 0.0.40
codegen_flags: <defaults>
</compile_context>

<pallas_src>
import jax
import jax.numpy as jnp
from jax.experimental import pallas as pl
from jax.experimental.pallas import tpu as pltpu


# ----------------------------------------------------------------------------
# Fused kernel.
#   x_ref, y_ref, yt_ref : (1, C, RS, 128) or (1, C, S) VMEM tiles
#   w_ref                : (C, C)  SMEM, w[co, ci]
#   b_ref                : (C,)    SMEM
#   out_ref              : conv result tile (same shape as x tile)
#   st_ref               : (1, 2, C, 8) per-(batch,channel) loss statistics,
#                          accumulated across the spatial grid axis.
#         stat columns: [sum|d|, sum d^2, sum a, sum b, sum a^2, sum b^2, sum a*b, 0]
#         pair 0 = (outputs, y), pair 1 = (x, yt)
# ----------------------------------------------------------------------------
def fused_finetune_kernel(x_ref, y_ref, yt_ref, w_ref, b_ref, out_ref, st_ref):
    k = pl.program_id(1)

    @pl.when(k == 0)
    def _init():
        st_ref[...] = jnp.zeros_like(st_ref)

    xv = x_ref[0]            # (C, RS, 128) or (C, S)
    yv = y_ref[0]
    ytv = yt_ref[0]
    C = xv.shape[0]

    # Pointwise (1x1) conv as C*C scalar*vector FMAs on the VPU (C small & static).
    rows = []
    for co in range(C):
        acc = xv[0:1] * w_ref[co, 0]
        for ci in range(1, C):
            acc = acc + xv[ci:ci + 1] * w_ref[co, ci]
        rows.append(acc + b_ref[co])
    o = jnp.concatenate(rows, axis=0)                     # same shape as xv, f32
    out_ref[0] = o.astype(out_ref.dtype)

    # Per-channel reductions for the l1+l2+ssim loss (XLU; free filler in a mem-bound
    # kernel). Reduce everything-but-channel down to (C, 1).
    def _red(t):
        r = t
        while r.ndim > 2:
            r = jnp.sum(r, axis=1)
        return jnp.sum(r, axis=-1, keepdims=True)         # (C, 1)

    def stats_block(a, b2):
        d = a - b2
        cols = [
            _red(jnp.abs(d)),
            _red(d * d),
            _red(a),
            _red(b2),
            _red(a * a),
            _red(b2 * b2),
            _red(a * b2),
            jnp.zeros((C, 1), jnp.float32),
        ]
        return jnp.concatenate(cols, axis=-1)              # (C, 8)

    st_ref[0, 0] = st_ref[0, 0] + stats_block(o, yv)       # loss(outputs, y) stats
    st_ref[0, 1] = st_ref[0, 1] + stats_block(xv, ytv)     # loss(x, yt)     stats


# ----------------------------------------------------------------------------
# Wrapper: one pallas_call produces the conv output and both stat tensors.
# ----------------------------------------------------------------------------
def _fused_call(xr, yr, ytr, w, b, blk_rows):
    B, C = xr.shape[0], xr.shape[1]

    if xr.ndim == 4:                                       # (B, C, R, 128) dense layout
        R, L = xr.shape[2], xr.shape[3]
        grid = (B, R // blk_rows)
        blk = (1, C, blk_rows, L)
        imap = lambda bi, ki: (bi, 0, ki, 0)
        st_imap = lambda bi, ki: (bi, 0, 0, 0)
        S = R * L
    else:                                                  # (B, C, S) fallback (1 tile)
        S = xr.shape[2]
        grid = (B, 1)
        blk = (1, C, S)
        imap = lambda bi, ki: (bi, 0, ki)
        st_imap = lambda bi, ki: (bi, 0, 0, 0)

    flops = B * S * C * (2 * C) + 2 * B * C * S * 14
    bytes_accessed = 4 * B * C * S * 4 + B * 2 * C * 8 * 4

    return pl.pallas_call(
        fused_finetune_kernel,
        out_shape=(
            jax.ShapeDtypeStruct(xr.shape, jnp.float32),
            jax.ShapeDtypeStruct((B, 2, C, 8), jnp.float32),
        ),
        grid_spec=pltpu.PrefetchScalarGridSpec(
            num_scalar_prefetch=0,
            grid=grid,
            in_specs=[
                pl.BlockSpec(blk, imap),
                pl.BlockSpec(blk, imap),
                pl.BlockSpec(blk, imap),
                pl.BlockSpec(memory_space=pltpu.MemorySpace.SMEM),
                pl.BlockSpec(memory_space=pltpu.MemorySpace.SMEM),
            ],
            out_specs=[
                pl.BlockSpec(blk, imap),
                pl.BlockSpec((1, 2, C, 8), st_imap),
            ],
        ),
        compiler_params=pltpu.CompilerParams(
            dimension_semantics=("parallel", "arbitrary")),
        cost_estimate=pl.CostEstimate(
            flops=flops, transcendentals=0, bytes_accessed=bytes_accessed),
    )(xr, yr, ytr, w, b)


def _pick_rows(R, target=512):
    """Largest multiple-of-8 divisor of R not exceeding `target` (full R if impossible)."""
    if R <= 8 or R % 8 != 0:
        return R
    best = 8
    d = 8
    lim = min(R, target)
    while d <= lim:
        if R % d == 0:
            best = d
        d += 8
    return best


def _loss_from_stats(st_pair, n):
    # st_pair: (B, C, 8)
    s_abs = st_pair[..., 0]
    s_sq = st_pair[..., 1]
    s_a = st_pair[..., 2]
    s_b = st_pair[..., 3]
    s_aa = st_pair[..., 4]
    s_bb = st_pair[..., 5]
    s_ab = st_pair[..., 6]

    l1 = jnp.mean(s_abs) / n
    l2 = jnp.mean(s_sq) / n

    mu_a = s_a / n
    mu_b = s_b / n
    var_a = s_aa / n - mu_a * mu_a
    var_b = s_bb / n - mu_b * mu_b
    cov = s_ab / n - mu_a * mu_b

    data_range = 1.0
    c1 = (0.01 * data_range) ** 2
    c2 = (0.03 * data_range) ** 2
    ssim = ((2.0 * mu_a * mu_b + c1) * (2.0 * cov + c2)) / (
        (mu_a * mu_a + mu_b * mu_b + c1) * (var_a + var_b + c2))
    return l1 + l2 + (1.0 - jnp.mean(ssim))


def finetune_forward(x, y, yt, w, b):
    B, C, H, W = x.shape
    S = H * W

    if S % 128 == 0:
        # Dense (sublane, lane) layout: (B, C, S//128, 128); pure reshape, no transpose.
        R = S // 128
        blk_rows = _pick_rows(R)
        xr = x.reshape(B, C, R, 128)
        yr = y.reshape(B, C, R, 128)
        ytr = yt.reshape(B, C, R, 128)
    else:
        # TODO(synk): ragged spatial sizes fall back to a single (C, S) tile per batch.
        blk_rows = 0
        xr = x.reshape(B, C, S)
        yr = y.reshape(B, C, S)
        ytr = yt.reshape(B, C, S)

    outr, st = _fused_call(xr, yr, ytr, w, b, blk_rows)

    n = jnp.float32(S)
    loss = _loss_from_stats(st[:, 0], n) + 2.0 * _loss_from_stats(st[:, 1], n)
    outputs = outr.reshape(B, C, H, W)
    return loss, outputs


if __name__ == "__main__":
    B, C, H, W = 2, 4, 16, 16
    key = jax.random.PRNGKey(0)
    kx, ky, kyt, kw, kb = jax.random.split(key, 5)

    x = jax.random.uniform(kx, (B, C, H, W), dtype=jnp.float32)
    y = jax.random.uniform(ky, (B, C, H, W), dtype=jnp.float32)
    yt = jax.random.uniform(kyt, (B, C, H, W), dtype=jnp.float32)

    # Synthetic pointwise-conv model parameters: w[co, ci], b[co].
    w = jax.random.normal(kw, (C, C), dtype=jnp.float32) * 0.1
    bias = jax.random.normal(kb, (C,), dtype=jnp.float32) * 0.01

    loss, outputs = jax.jit(finetune_forward)(x, y, yt, w, bias)
    jax.block_until_ready(loss)
    jax.block_until_ready(outputs)

    assert outputs.shape == (B, C, H, W)
    assert jnp.isfinite(loss)
    print("KERNEL_OK")
</pallas_src>

<mosaic_0001>
module attributes {stable_mosaic.version = 11 : i64} {
  func.func @fused_finetune_kernel(%arg0: i32, %arg1: i32, %arg2: memref<1x4x2x128xf32, #tpu.memory_space<vmem>>, %arg3: memref<1x4x2x128xf32, #tpu.memory_space<vmem>>, %arg4: memref<1x4x2x128xf32, #tpu.memory_space<vmem>>, %arg5: memref<4x4xf32, #tpu.memory_space<smem>>, %arg6: memref<4xf32, #tpu.memory_space<smem>>, %arg7: memref<1x4x2x128xf32, #tpu.memory_space<vmem>>, %arg8: memref<1x2x4x8xf32, #tpu.memory_space<vmem>>) attributes {dimension_semantics = [#tpu.dimension_semantics<parallel>, #tpu.dimension_semantics<arbitrary>], iteration_bounds = array<i64: 2, 1>, scalar_prefetch = 0 : i64, scratch_operands = 0 : i64, tpu.core_type = #tpu.core_type<tc>, window_params = [{transform_indices = @transform_0, window_bounds = array<i64: 1, 4, 2, 128>}, {transform_indices = @transform_1, window_bounds = array<i64: 1, 4, 2, 128>}, {transform_indices = @transform_2, window_bounds = array<i64: 1, 4, 2, 128>}, {transform_indices = @transform_3, window_bounds = array<i64: 4, 4>}, {transform_indices = @transform_4, window_bounds = array<i64: 4>}, {transform_indices = @transform_5, window_bounds = array<i64: 1, 4, 2, 128>}, {transform_indices = @transform_6, window_bounds = array<i64: 1, 2, 4, 8>}]} {
    %c0_i32 = arith.constant 0 : i32
    %0 = arith.cmpi eq, %arg1, %c0_i32 : i32
    %1 = arith.extui %0 : i1 to i32
    %c0_i32_0 = arith.constant 0 : i32
    %2 = arith.cmpi ne, %1, %c0_i32_0 : i32
    scf.if %2 {
      %cst_94 = arith.constant 0.000000e+00 : f32
      %171 = vector.broadcast %cst_94 : f32 to vector<1x2x4x8xf32>
      %c0_95 = arith.constant 0 : index
      %c0_96 = arith.constant 0 : index
      %c0_97 = arith.constant 0 : index
      %c0_98 = arith.constant 0 : index
      %172 = vector.load %arg8[%c0_95, %c0_96, %c0_97, %c0_98] : memref<1x2x4x8xf32, #tpu.memory_space<vmem>>, vector<1x2x4x8xf32>
      tpu.vector_store %arg8[%c0_95, %c0_96, %c0_97, %c0_98], %171 {strides = array<i32>} : memref<1x2x4x8xf32, #tpu.memory_space<vmem>>, vector<1x2x4x8xf32>,
    } else {
    }
    %c0 = arith.constant 0 : index
    %c0_1 = arith.constant 0 : index
    %c0_2 = arith.constant 0 : index
    %c0_3 = arith.constant 0 : index
    %3 = vector.load %arg2[%c0, %c0_1, %c0_2, %c0_3] : memref<1x4x2x128xf32, #tpu.memory_space<vmem>>, vector<1x4x2x128xf32>
    %4 = vector.shape_cast %3 : vector<1x4x2x128xf32> to vector<4x2x128xf32>
    %c0_4 = arith.constant 0 : index
    %c0_5 = arith.constant 0 : index
    %c0_6 = arith.constant 0 : index
    %c0_7 = arith.constant 0 : index
    %5 = vector.load %arg3[%c0_4, %c0_5, %c0_6, %c0_7] : memref<1x4x2x128xf32, #tpu.memory_space<vmem>>, vector<1x4x2x128xf32>
    %6 = vector.shape_cast %5 : vector<1x4x2x128xf32> to vector<4x2x128xf32>
    %c0_8 = arith.constant 0 : index
    %c0_9 = arith.constant 0 : index
    %c0_10 = arith.constant 0 : index
    %c0_11 = arith.constant 0 : index
    %7 = vector.load %arg4[%c0_8, %c0_9, %c0_10, %c0_11] : memref<1x4x2x128xf32, #tpu.memory_space<vmem>>, vector<1x4x2x128xf32>
    %8 = vector.shape_cast %7 : vector<1x4x2x128xf32> to vector<4x2x128xf32>
    %9 = vector.extract_strided_slice %4 {offsets = [0, 0, 0], sizes = [1, 2, 128], strides = [1, 1, 1]} : vector<4x2x128xf32> to vector<1x2x128xf32>
    %c0_12 = arith.constant 0 : index
    %c0_13 = arith.constant 0 : index
    %10 = memref.load %arg5[%c0_12, %c0_13] : memref<4x4xf32, #tpu.memory_space<smem>>
    %11 = vector.broadcast %10 : f32 to vector<1x2x128xf32>
    %12 = arith.mulf %9, %11 : vector<1x2x128xf32>
    %13 = vector.extract_strided_slice %4 {offsets = [1, 0, 0], sizes = [1, 2, 128], strides = [1, 1, 1]} : vector<4x2x128xf32> to vector<1x2x128xf32>
    %c0_14 = arith.constant 0 : index
    %c1 = arith.constant 1 : index
    %14 = memref.load %arg5[%c0_14, %c1] : memref<4x4xf32, #tpu.memory_space<smem>>
    %15 = vector.broadcast %14 : f32 to vector<1x2x128xf32>
    %16 = arith.mulf %13, %15 : vector<1x2x128xf32>
    %17 = arith.addf %12, %16 : vector<1x2x128xf32>
    %18 = vector.extract_strided_slice %4 {offsets = [2, 0, 0], sizes = [1, 2, 128], strides = [1, 1, 1]} : vector<4x2x128xf32> to vector<1x2x128xf32>
    %c0_15 = arith.constant 0 : index
    %c2 = arith.constant 2 : index
    %19 = memref.load %arg5[%c0_15, %c2] : memref<4x4xf32, #tpu.memory_space<smem>>
    %20 = vector.broadcast %19 : f32 to vector<1x2x128xf32>
    %21 = arith.mulf %18, %20 : vector<1x2x128xf32>
    %22 = arith.addf %17, %21 : vector<1x2x128xf32>
    %23 = vector.extract_strided_slice %4 {offsets = [3, 0, 0], sizes = [1, 2, 128], strides = [1, 1, 1]} : vector<4x2x128xf32> to vector<1x2x128xf32>
    %c0_16 = arith.constant 0 : index
    %c3 = arith.constant 3 : index
    %24 = memref.load %arg5[%c0_16, %c3] : memref<4x4xf32, #tpu.memory_space<smem>>
    %25 = vector.broadcast %24 : f32 to vector<1x2x128xf32>
    %26 = arith.mulf %23, %25 : vector<1x2x128xf32>
    %27 = arith.addf %22, %26 : vector<1x2x128xf32>
    %c0_17 = arith.constant 0 : index
    %28 = memref.load %arg6[%c0_17] : memref<4xf32, #tpu.memory_space<smem>>
    %29 = vector.broadcast %28 : f32 to vector<1x2x128xf32>
    %30 = arith.addf %27, %29 : vector<1x2x128xf32>
    %31 = vector.extract_strided_slice %4 {offsets = [0, 0, 0], sizes = [1, 2, 128], strides = [1, 1, 1]} : vector<4x2x128xf32> to vector<1x2x128xf32>
    %c1_18 = arith.constant 1 : index
    %c0_19 = arith.constant 0 : index
    %32 = memref.load %arg5[%c1_18, %c0_19] : memref<4x4xf32, #tpu.memory_space<smem>>
    %33 = vector.broadcast %32 : f32 to vector<1x2x128xf32>
    %34 = arith.mulf %31, %33 : vector<1x2x128xf32>
    %35 = vector.extract_strided_slice %4 {offsets = [1, 0, 0], sizes = [1, 2, 128], strides = [1, 1, 1]} : vector<4x2x128xf32> to vector<1x2x128xf32>
    %c1_20 = arith.constant 1 : index
    %c1_21 = arith.constant 1 : index
    %36 = memref.load %arg5[%c1_20, %c1_21] : memref<4x4xf32, #tpu.memory_space<smem>>
    %37 = vector.broadcast %36 : f32 to vector<1x2x128xf32>
    %38 = arith.mulf %35, %37 : vector<1x2x128xf32>
    %39 = arith.addf %34, %38 : vector<1x2x128xf32>
    %40 = vector.extract_strided_slice %4 {offsets = [2, 0, 0], sizes = [1, 2, 128], strides = [1, 1, 1]} : vector<4x2x128xf32> to vector<1x2x128xf32>
    %c1_22 = arith.constant 1 : index
    %c2_23 = arith.constant 2 : index
    %41 = memref.load %arg5[%c1_22, %c2_23] : memref<4x4xf32, #tpu.memory_space<smem>>
    %42 = vector.broadcast %41 : f32 to vector<1x2x128xf32>
    %43 = arith.mulf %40, %42 : vector<1x2x128xf32>
    %44 = arith.addf %39, %43 : vector<1x2x128xf32>
    %45 = vector.extract_strided_slice %4 {offsets = [3, 0, 0], sizes = [1, 2, 128], strides = [1, 1, 1]} : vector<4x2x128xf32> to vector<1x2x128xf32>
    %c1_24 = arith.constant 1 : index
    %c3_25 = arith.constant 3 : index
    %46 = memref.load %arg5[%c1_24, %c3_25] : memref<4x4xf32, #tpu.memory_space<smem>>
    %47 = vector.broadcast %46 : f32 to vector<1x2x128xf32>
    %48 = arith.mulf %45, %47 : vector<1x2x128xf32>
    %49 = arith.addf %44, %48 : vector<1x2x128xf32>
    %c1_26 = arith.constant 1 : index
    %50 = memref.load %arg6[%c1_26] : memref<4xf32, #tpu.memory_space<smem>>
    %51 = vector.broadcast %50 : f32 to vector<1x2x128xf32>
    %52 = arith.addf %49, %51 : vector<1x2x128xf32>
    %53 = vector.extract_strided_slice %4 {offsets = [0, 0, 0], sizes = [1, 2, 128], strides = [1, 1, 1]} : vector<4x2x128xf32> to vector<1x2x128xf32>
    %c2_27 = arith.constant 2 : index
    %c0_28 = arith.constant 0 : index
    %54 = memref.load %arg5[%c2_27, %c0_28] : memref<4x4xf32, #tpu.memory_space<smem>>
    %55 = vector.broadcast %54 : f32 to vector<1x2x128xf32>
    %56 = arith.mulf %53, %55 : vector<1x2x128xf32>
    %57 = vector.extract_strided_slice %4 {offsets = [1, 0, 0], sizes = [1, 2, 128], strides = [1, 1, 1]} : vector<4x2x128xf32> to vector<1x2x128xf32>
    %c2_29 = arith.constant 2 : index
    %c1_30 = arith.constant 1 : index
    %58 = memref.load %arg5[%c2_29, %c1_30] : memref<4x4xf32, #tpu.memory_space<smem>>
    %59 = vector.broadcast %58 : f32 to vector<1x2x128xf32>
    %60 = arith.mulf %57, %59 : vector<1x2x128xf32>
    %61 = arith.addf %56, %60 : vector<1x2x128xf32>
    %62 = vector.extract_strided_slice %4 {offsets = [2, 0, 0], sizes = [1, 2, 128], strides = [1, 1, 1]} : vector<4x2x128xf32> to vector<1x2x128xf32>
    %c2_31 = arith.constant 2 : index
    %c2_32 = arith.constant 2 : index
    %63 = memref.load %arg5[%c2_31, %c2_32] : memref<4x4xf32, #tpu.memory_space<smem>>
    %64 = vector.broadcast %63 : f32 to vector<1x2x128xf32>
    %65 = arith.mulf %62, %64 : vector<1x2x128xf32>
    %66 = arith.addf %61, %65 : vector<1x2x128xf32>
    %67 = vector.extract_strided_slice %4 {offsets = [3, 0, 0], sizes = [1, 2, 128], strides = [1, 1, 1]} : vector<4x2x128xf32> to vector<1x2x128xf32>
    %c2_33 = arith.constant 2 : index
    %c3_34 = arith.constant 3 : index
    %68 = memref.load %arg5[%c2_33, %c3_34] : memref<4x4xf32, #tpu.memory_space<smem>>
    %69 = vector.broadcast %68 : f32 to vector<1x2x128xf32>
    %70 = arith.mulf %67, %69 : vector<1x2x128xf32>
    %71 = arith.addf %66, %70 : vector<1x2x128xf32>
    %c2_35 = arith.constant 2 : index
    %72 = memref.load %arg6[%c2_35] : memref<4xf32, #tpu.memory_space<smem>>
    %73 = vector.broadcast %72 : f32 to vector<1x2x128xf32>
    %74 = arith.addf %71, %73 : vector<1x2x128xf32>
    %75 = vector.extract_strided_slice %4 {offsets = [0, 0, 0], sizes = [1, 2, 128], strides = [1, 1, 1]} : vector<4x2x128xf32> to vector<1x2x128xf32>
    %c3_36 = arith.constant 3 : index
    %c0_37 = arith.constant 0 : index
    %76 = memref.load %arg5[%c3_36, %c0_37] : memref<4x4xf32, #tpu.memory_space<smem>>
    %77 = vector.broadcast %76 : f32 to vector<1x2x128xf32>
    %78 = arith.mulf %75, %77 : vector<1x2x128xf32>
    %79 = vector.extract_strided_slice %4 {offsets = [1, 0, 0], sizes = [1, 2, 128], strides = [1, 1, 1]} : vector<4x2x128xf32> to vector<1x2x128xf32>
    %c3_38 = arith.constant 3 : index
    %c1_39 = arith.constant 1 : index
    %80 = memref.load %arg5[%c3_38, %c1_39] : memref<4x4xf32, #tpu.memory_space<smem>>
    %81 = vector.broadcast %80 : f32 to vector<1x2x128xf32>
    %82 = arith.mulf %79, %81 : vector<1x2x128xf32>
    %83 = arith.addf %78, %82 : vector<1x2x128xf32>
    %84 = vector.extract_strided_slice %4 {offsets = [2, 0, 0], sizes = [1, 2, 128], strides = [1, 1, 1]} : vector<4x2x128xf32> to vector<1x2x128xf32>
    %c3_40 = arith.constant 3 : index
    %c2_41 = arith.constant 2 : index
    %85 = memref.load %arg5[%c3_40, %c2_41] : memref<4x4xf32, #tpu.memory_space<smem>>
    %86 = vector.broadcast %85 : f32 to vector<1x2x128xf32>
    %87 = arith.mulf %84, %86 : vector<1x2x128xf32>
    %88 = arith.addf %83, %87 : vector<1x2x128xf32>
    %89 = vector.extract_strided_slice %4 {offsets = [3, 0, 0], sizes = [1, 2, 128], strides = [1, 1, 1]} : vector<4x2x128xf32> to vector<1x2x128xf32>
    %c3_42 = arith.constant 3 : index
    %c3_43 = arith.constant 3 : index
    %90 = memref.load %arg5[%c3_42, %c3_43] : memref<4x4xf32, #tpu.memory_space<smem>>
    %91 = vector.broadcast %90 : f32 to vector<1x2x128xf32>
    %92 = arith.mulf %89, %91 : vector<1x2x128xf32>
    %93 = arith.addf %88, %92 : vector<1x2x128xf32>
    %c3_44 = arith.constant 3 : index
    %94 = memref.load %arg6[%c3_44] : memref<4xf32, #tpu.memory_space<smem>>
    %95 = vector.broadcast %94 : f32 to vector<1x2x128xf32>
    %96 = arith.addf %93, %95 : vector<1x2x128xf32>
    %97 = tpu.concatenate %30, %52, %74, %96 in 0 : vector<1x2x128xf32>, vector<1x2x128xf32>, vector<1x2x128xf32>, vector<1x2x128xf32> -> vector<4x2x128xf32>
    %c0_45 = arith.constant 0 : index
    %c0_46 = arith.constant 0 : index
    %c0_47 = arith.constant 0 : index
    %c0_48 = arith.constant 0 : index
    %98 = vector.load %arg7[%c0_45, %c0_46, %c0_47, %c0_48] : memref<1x4x2x128xf32, #tpu.memory_space<vmem>>, vector<1x4x2x128xf32>
    %99 = vector.shape_cast %98 : vector<1x4x2x128xf32> to vector<4x2x128xf32>
    %100 = vector.shape_cast %97 : vector<4x2x128xf32> to vector<1x4x2x128xf32>
    tpu.vector_store %arg7[%c0_45, %c0_46, %c0_47, %c0_48], %100 {strides = array<i32>} : memref<1x4x2x128xf32, #tpu.memory_space<vmem>>, vector<1x4x2x128xf32>,
    %c0_49 = arith.constant 0 : index
    %c0_50 = arith.constant 0 : index
    %c0_51 = arith.constant 0 : index
    %c0_52 = arith.constant 0 : index
    %101 = vector.load %arg8[%c0_49, %c0_50, %c0_51, %c0_52] : memref<1x2x4x8xf32, #tpu.memory_space<vmem>>, vector<1x1x4x8xf32>
    %102 = vector.shape_cast %101 : vector<1x1x4x8xf32> to vector<4x8xf32>
    %103 = arith.subf %97, %6 : vector<4x2x128xf32>
    %104 = math.absf %103 : vector<4x2x128xf32>
    %cst = arith.constant dense<0.000000e+00> : vector<4x128xf32>
    %105 = vector.multi_reduction <add>, %104, %cst [1] : vector<4x2x128xf32> to vector<4x128xf32>
    %cst_53 = arith.constant dense<0.000000e+00> : vector<4xf32>
    %106 = vector.multi_reduction <add>, %105, %cst_53 [1] : vector<4x128xf32> to vector<4xf32>
    %107 = vector.shape_cast %106 : vector<4xf32> to vector<4x1xf32>
    %108 = arith.mulf %103, %103 : vector<4x2x128xf32>
    %cst_54 = arith.constant dense<0.000000e+00> : vector<4x128xf32>
    %109 = vector.multi_reduction <add>, %108, %cst_54 [1] : vector<4x2x128xf32> to vector<4x128xf32>
    %cst_55 = arith.constant dense<0.000000e+00> : vector<4xf32>
    %110 = vector.multi_reduction <add>, %109, %cst_55 [1] : vector<4x128xf32> to vector<4xf32>
    %111 = vector.shape_cast %110 : vector<4xf32> to vector<4x1xf32>
    %cst_56 = arith.constant dense<0.000000e+00> : vector<4x128xf32>
    %112 = vector.multi_reduction <add>, %97, %cst_56 [1] : vector<4x2x128xf32> to vector<4x128xf32>
    %cst_57 = arith.constant dense<0.000000e+00> : vector<4xf32>
    %113 = vector.multi_reduction <add>, %112, %cst_57 [1] : vector<4x128xf32> to vector<4xf32>
    %114 = vector.shape_cast %113 : vector<4xf32> to vector<4x1xf32>
    %cst_58 = arith.constant dense<0.000000e+00> : vector<4x128xf32>
    %115 = vector.multi_reduction <add>, %6, %cst_58 [1] : vector<4x2x128xf32> to vector<4x128xf32>
    %cst_59 = arith.constant dense<0.000000e+00> : vector<4xf32>
    %116 = vector.multi_reduction <add>, %115, %cst_59 [1] : vector<4x128xf32> to vector<4xf32>
    %117 = vector.shape_cast %116 : vector<4xf32> to vector<4x1xf32>
    %118 = arith.mulf %97, %97 : vector<4x2x128xf32>
    %cst_60 = arith.constant dense<0.000000e+00> : vector<4x128xf32>
    %119 = vector.multi_reduction <add>, %118, %cst_60 [1] : vector<4x2x128xf32> to vector<4x128xf32>
    %cst_61 = arith.constant dense<0.000000e+00> : vector<4xf32>
    %120 = vector.multi_reduction <add>, %119, %cst_61 [1] : vector<4x128xf32> to vector<4xf32>
    %121 = vector.shape_cast %120 : vector<4xf32> to vector<4x1xf32>
    %122 = arith.mulf %6, %6 : vector<4x2x128xf32>
    %cst_62 = arith.constant dense<0.000000e+00> : vector<4x128xf32>
    %123 = vector.multi_reduction <add>, %122, %cst_62 [1] : vector<4x2x128xf32> to vector<4x128xf32>
    %cst_63 = arith.constant dense<0.000000e+00> : vector<4xf32>
    %124 = vector.multi_reduction <add>, %123, %cst_63 [1] : vector<4x128xf32> to vector<4xf32>
    %125 = vector.shape_cast %124 : vector<4xf32> to vector<4x1xf32>
    %126 = arith.mulf %97, %6 : vector<4x2x128xf32>
    %cst_64 = arith.constant dense<0.000000e+00> : vector<4x128xf32>
    %127 = vector.multi_reduction <add>, %126, %cst_64 [1] : vector<4x2x128xf32> to vector<4x128xf32>
    %cst_65 = arith.constant dense<0.000000e+00> : vector<4xf32>
    %128 = vector.multi_reduction <add>, %127, %cst_65 [1] : vector<4x128xf32> to vector<4xf32>
    %129 = vector.shape_cast %128 : vector<4xf32> to vector<4x1xf32>
    %cst_66 = arith.constant 0.000000e+00 : f32
    %130 = vector.broadcast %cst_66 : f32 to vector<4x1xf32>
    %131 = tpu.concatenate %107, %111, %114, %117, %121, %125, %129, %130 in 1 : vector<4x1xf32>, vector<4x1xf32>, vector<4x1xf32>, vector<4x1xf32>, vector<4x1xf32>, vector<4x1xf32>, vector<4x1xf32>, vector<4x1xf32> -> vector<4x8xf32>
    %132 = arith.addf %102, %131 : vector<4x8xf32>
    %c0_67 = arith.constant 0 : index
    %c0_68 = arith.constant 0 : index
    %c0_69 = arith.constant 0 : index
    %c0_70 = arith.constant 0 : index
    %133 = vector.load %arg8[%c0_67, %c0_68, %c0_69, %c0_70] : memref<1x2x4x8xf32, #tpu.memory_space<vmem>>, vector<1x1x4x8xf32>
    %134 = vector.shape_cast %133 : vector<1x1x4x8xf32> to vector<4x8xf32>
    %135 = vector.shape_cast %132 : vector<4x8xf32> to vector<1x1x4x8xf32>
    tpu.vector_store %arg8[%c0_67, %c0_68, %c0_69, %c0_70], %135 {strides = array<i32>} : memref<1x2x4x8xf32, #tpu.memory_space<vmem>>, vector<1x1x4x8xf32>,
    %c0_71 = arith.constant 0 : index
    %c1_72 = arith.constant 1 : index
    %c0_73 = arith.constant 0 : index
    %c0_74 = arith.constant 0 : index
    %136 = vector.load %arg8[%c0_71, %c1_72, %c0_73, %c0_74] : memref<1x2x4x8xf32, #tpu.memory_space<vmem>>, vector<1x1x4x8xf32>
    %137 = vector.shape_cast %136 : vector<1x1x4x8xf32> to vector<4x8xf32>
    %138 = arith.subf %4, %8 : vector<4x2x128xf32>
    %139 = math.absf %138 : vector<4x2x128xf32>
    %cst_75 = arith.constant dense<0.000000e+00> : vector<4x128xf32>
    %140 = vector.multi_reduction <add>, %139, %cst_75 [1] : vector<4x2x128xf32> to vector<4x128xf32>
    %cst_76 = arith.constant dense<0.000000e+00> : vector<4xf32>
    %141 = vector.multi_reduction <add>, %140, %cst_76 [1] : vector<4x128xf32> to vector<4xf32>
    %142 = vector.shape_cast %141 : vector<4xf32> to vector<4x1xf32>
    %143 = arith.mulf %138, %138 : vector<4x2x128xf32>
    %cst_77 = arith.constant dense<0.000000e+00> : vector<4x128xf32>
    %144 = vector.multi_reduction <add>, %143, %cst_77 [1] : vector<4x2x128xf32> to vector<4x128xf32>
    %cst_78 = arith.constant dense<0.000000e+00> : vector<4xf32>
    %145 = vector.multi_reduction <add>, %144, %cst_78 [1] : vector<4x128xf32> to vector<4xf32>
    %146 = vector.shape_cast %145 : vector<4xf32> to vector<4x1xf32>
    %cst_79 = arith.constant dense<0.000000e+00> : vector<4x128xf32>
    %147 = vector.multi_reduction <add>, %4, %cst_79 [1] : vector<4x2x128xf32> to vector<4x128xf32>
    %cst_80 = arith.constant dense<0.000000e+00> : vector<4xf32>
    %148 = vector.multi_reduction <add>, %147, %cst_80 [1] : vector<4x128xf32> to vector<4xf32>
    %149 = vector.shape_cast %148 : vector<4xf32> to vector<4x1xf32>
    %cst_81 = arith.constant dense<0.000000e+00> : vector<4x128xf32>
    %150 = vector.multi_reduction <add>, %8, %cst_81 [1] : vector<4x2x128xf32> to vector<4x128xf32>
    %cst_82 = arith.constant dense<0.000000e+00> : vector<4xf32>
    %151 = vector.multi_reduction <add>, %150, %cst_82 [1] : vector<4x128xf32> to vector<4xf32>
    %152 = vector.shape_cast %151 : vector<4xf32> to vector<4x1xf32>
    %153 = arith.mulf %4, %4 : vector<4x2x128xf32>
    %cst_83 = arith.constant dense<0.000000e+00> : vector<4x128xf32>
    %154 = vector.multi_reduction <add>, %153, %cst_83 [1] : vector<4x2x128xf32> to vector<4x128xf32>
    %cst_84 = arith.constant dense<0.000000e+00> : vector<4xf32>
    %155 = vector.multi_reduction <add>, %154, %cst_84 [1] : vector<4x128xf32> to vector<4xf32>
    %156 = vector.shape_cast %155 : vector<4xf32> to vector<4x1xf32>
    %157 = arith.mulf %8, %8 : vector<4x2x128xf32>
    %cst_85 = arith.constant dense<0.000000e+00> : vector<4x128xf32>
    %158 = vector.multi_reduction <add>, %157, %cst_85 [1] : vector<4x2x128xf32> to vector<4x128xf32>
    %cst_86 = arith.constant dense<0.000000e+00> : vector<4xf32>
    %159 = vector.multi_reduction <add>, %158, %cst_86 [1] : vector<4x128xf32> to vector<4xf32>
    %160 = vector.shape_cast %159 : vector<4xf32> to vector<4x1xf32>
    %161 = arith.mulf %4, %8 : vector<4x2x128xf32>
    %cst_87 = arith.constant dense<0.000000e+00> : vector<4x128xf32>
    %162 = vector.multi_reduction <add>, %161, %cst_87 [1] : vector<4x2x128xf32> to vector<4x128xf32>
    %cst_88 = arith.constant dense<0.000000e+00> : vector<4xf32>
    %163 = vector.multi_reduction <add>, %162, %cst_88 [1] : vector<4x128xf32> to vector<4xf32>
    %164 = vector.shape_cast %163 : vector<4xf32> to vector<4x1xf32>
    %cst_89 = arith.constant 0.000000e+00 : f32
    %165 = vector.broadcast %cst_89 : f32 to vector<4x1xf32>
    %166 = tpu.concatenate %142, %146, %149, %152, %156, %160, %164, %165 in 1 : vector<4x1xf32>, vector<4x1xf32>, vector<4x1xf32>, vector<4x1xf32>, vector<4x1xf32>, vector<4x1xf32>, vector<4x1xf32>, vector<4x1xf32> -> vector<4x8xf32>
    %167 = arith.addf %137, %166 : vector<4x8xf32>
    %c0_90 = arith.constant 0 : index
    %c1_91 = arith.constant 1 : index
    %c0_92 = arith.constant 0 : index
    %c0_93 = arith.constant 0 : index
    %168 = vector.load %arg8[%c0_90, %c1_91, %c0_92, %c0_93] : memref<1x2x4x8xf32, #tpu.memory_space<vmem>>, vector<1x1x4x8xf32>
    %169 = vector.shape_cast %168 : vector<1x1x4x8xf32> to vector<4x8xf32>
    %170 = vector.shape_cast %167 : vector<4x8xf32> to vector<1x1x4x8xf32>
    tpu.vector_store %arg8[%c0_90, %c1_91, %c0_92, %c0_93], %170 {strides = array<i32>} : memref<1x2x4x8xf32, #tpu.memory_space<vmem>>, vector<1x1x4x8xf32>,
    return
  }
  func.func @transform_0(%arg0: i32, %arg1: i32) -> (i32, i32, i32, i32) {
    %c0_i32 = arith.constant 0 : i32
    %c0_i32_0 = arith.constant 0 : i32
    %c0_i32_1 = arith.constant 0 : i32
    return %arg0, %c0_i32, %arg1, %c0_i32_0 : i32, i32, i32, i32
  }
  func.func @transform_1(%arg0: i32, %arg1: i32) -> (i32, i32, i32, i32) {
    %c0_i32 = arith.constant 0 : i32
    %c0_i32_0 = arith.constant 0 : i32
    %c0_i32_1 = arith.constant 0 : i32
    return %arg0, %c0_i32, %arg1, %c0_i32_0 : i32, i32, i32, i32
  }
  func.func @transform_2(%arg0: i32, %arg1: i32) -> (i32, i32, i32, i32) {
    %c0_i32 = arith.constant 0 : i32
    %c0_i32_0 = arith.constant 0 : i32
    %c0_i32_1 = arith.constant 0 : i32
    return %arg0, %c0_i32, %arg1, %c0_i32_0 : i32, i32, i32, i32
  }
  func.func @transform_3(%arg0: i32, %arg1: i32) -> (i32, i32) {
    %c0_i32 = arith.constant 0 : i32
    %c0_i32_0 = arith.constant 0 : i32
    %c0_i32_1 = arith.constant 0 : i32
    return %c0_i32, %c0_i32_0 : i32, i32
  }
  func.func @transform_4(%arg0: i32, %arg1: i32) -> i32 {
    %c0_i32 = arith.constant 0 : i32
    %c0_i32_0 = arith.constant 0 : i32
    return %c0_i32 : i32
  }
  func.func @transform_5(%arg0: i32, %arg1: i32) -> (i32, i32, i32, i32) {
    %c0_i32 = arith.constant 0 : i32
    %c0_i32_0 = arith.constant 0 : i32
    %c0_i32_1 = arith.constant 0 : i32
    return %arg0, %c0_i32, %arg1, %c0_i32_0 : i32, i32, i32, i32
  }
  func.func @transform_6(%arg0: i32, %arg1: i32) -> (i32, i32, i32, i32) {
    %c0_i32 = arith.constant 0 : i32
    %c0_i32_0 = arith.constant 0 : i32
    %c0_i32_1 = arith.constant 0 : i32
    %c0_i32_2 = arith.constant 0 : i32
    return %arg0, %c0_i32, %c0_i32_0, %c0_i32_1 : i32, i32, i32, i32
  }
}

</mosaic_0001>

<llo_original>
// kernel: finetune_forward.1
$region0: #{finetune_forward.1}
  #allocation0 [shape = 'u32[]', space=smem, size = 0x4, offset = 0x4, fixed_abs, tag = 'smem constant byte address 0x4 - core index']
  #allocation1 [shape = 'u32[144,128]{1,0:T(1,128)}', space=vmem, size = 0x12000, scoped, tag = 'internal scratch']
  %s0 = inlined_call_operand.vmem [shape: f32[2,4,2,128], index: 0, kind: input, shape index: {}]
  %s1 = inlined_call_operand.vmem [shape: f32[2,4,2,128], index: 1, kind: input, shape index: {}]
  %s2 = inlined_call_operand.vmem [shape: f32[2,4,2,128], index: 2, kind: input, shape index: {}]
  %s3 = inlined_call_operand.vmem [shape: f32[4,4], index: 3, kind: input, shape index: {}]
  %s4 = inlined_call_operand.vmem [shape: f32[4], index: 4, kind: input, shape index: {}]
  %s5 = inlined_call_operand.vmem [shape: f32[2,4,2,128], index: 5, kind: output, shape index: {0}]
  %s6 = inlined_call_operand.vmem [shape: f32[2,2,4,8], index: 6, kind: output, shape index: {1}]
  %7 = xla_tuple %s5, %s6
  %s8 = sld [smem:[#allocation0]]
  $region73: #{finetune_forward.1} parent=0
    _
  %s10 = ssub.s32 1, %s8
  %s11 = scalar_select 0, %s10, %s8
  $region1: #{finetune_forward.1} parent=0
    #allocation2 [shape = 'u8[2048]{0}', space=smem, size = 0x800, scoped, tag = 'input window, operand 3, single buffered']
    #allocation3 [shape = 's32[2]{0}', space=sflag, size = 0x8, scoped, tag = 'scoped memory for finetune_forward.1']
    #allocation4 [shape = 'u8[512]{0}', space=smem, size = 0x200, scoped, tag = 'input window, operand 4, single buffered']
    #allocation5 [shape = 's32[1]{0}', space=sflag, size = 0x4, scoped, tag = 'scoped memory for finetune_forward.1']
    %12 = vsyncpa [#allocation3], 0
    %13 = vsyncpa [#allocation5], 0
    loop: start=0, step=1, limit=4
    $region2: #{finetune_forward.1} parent=1 // loop_pre_header
      _
    $region3: #{finetune_forward.1} parent=1 // loop_header
      %s15 = sphi 0, %s19
      %p16 = scmp.ge.s32.totalorder %s15, 4
      %s22 = sphi 0, %s34
      %s23 = sphi 0, %s30
      %s24 = sphi 0, %s22
      %s25 = sphi 0, %s23
      %s26 = sphi 0, %s24
      %s27 = sphi 0, %s25
      %s39 = sphi 0, %s41
      %s42 = sphi 0, %s39
      %s43 = sphi 0, %s42
      %s59 = sphi 0, %s43
      %s67 = sphi 0, %s69
      %s70 = sphi 0, %s67
      %s71 = sphi 0, %s70
      %s87 = sphi 0, %s71
      %s95 = sphi 0, %s97
      %s98 = sphi 0, %s95
      %s99 = sphi 0, %s98
      %s115 = sphi 0, %s99
      %s119 = sphi 0, %s119
      %s121 = sphi 0, %s119
      %s122 = sphi 0, %s121
      %s136 = sphi 0, %s122
      %s140 = sphi 0, %s140
      %s142 = sphi 0, %s140
      %s143 = sphi 0, %s142
      %s157 = sphi 0, %s143
      %s165 = sphi 0, %s167
      %s168 = sphi 0, %s165
      %s169 = sphi 0, %s168
      %s185 = sphi 0, %s169
      %s191 = sphi 0, %s193
      %s194 = sphi 0, %s191
      %s195 = sphi 0, %s194
      %s211 = sphi 0, %s195
    $region4: #{finetune_forward.1} parent=1 // loop_header_branch
      %18 = sbr.rel (%p16) target = $region8
    $region5: #{finetune_forward.1} parent=1 // loop_body
      %s20 = ssub.s32 %s15, 1
      %s21 = ssub.s32 %s15, 2
      %s28 = sadd.s32 1, %s23
      %p29 = scmp.ge.s32.totalorder %s28, 1
      %s30 = scalar_select %p29, 0, %s28
      %s31 = sadd.s32 1, %s22
      %s32 = scalar_select %p29, %s31, %s22
      %p33 = scmp.ge.s32.totalorder %s32, 2
      %s34 = scalar_select %p33, 0, %s32
      %s35 = ssub.s32 %s22, %s34
      %s36 = ssub.s32 %s23, %s30
      %s37 = sor.u32 %s35, %s36
      %p38 = scmp.eq.s32.totalorder %s37, 0
      %s40 = sadd.s32 %s39, 1
      %s41 = scalar_select %p38, %s39, %s40
      %p44 = pneg %p38
      %p45 = scmp.eq.s32.totalorder %s15, 1
      %p46 = por %p44, %p45
      %p47 = scmp.ne.s32.totalorder %s39, %s42
      %p48 = scmp.eq.s32.totalorder %s15, 0
      %p49 = por %p47, %p48
      %p50 = scmp.ne.s32.totalorder %s39, %s42
      %p51 = scmp.eq.s32.totalorder %s20, 1
      %p52 = por %p50, %p51
      %p53 = scmp.ne.s32.totalorder %s42, %s43
      %p54 = scmp.eq.s32.totalorder %s20, 0
      %p55 = por %p53, %p54
      %p56 = scmp.ne.s32.totalorder %s42, %s43
      %p57 = scmp.eq.s32.totalorder %s21, 1
      %p58 = por %p56, %p57
      %p60 = scmp.ne.s32.totalorder %s43, %s59
      %p61 = scmp.eq.s32.totalorder %s21, 0
      %p62 = por %p60, %p61
      %s63 = ssub.s32 %s22, %s34
      %s64 = ssub.s32 %s23, %s30
      %s65 = sor.u32 %s63, %s64
      %p66 = scmp.eq.s32.totalorder %s65, 0
      %s68 = sadd.s32 %s67, 1
      %s69 = scalar_select %p66, %s67, %s68
      %p72 = pneg %p66
      %p73 = scmp.eq.s32.totalorder %s15, 1
      %p74 = por %p72, %p73
      %p75 = scmp.ne.s32.totalorder %s67, %s70
      %p76 = scmp.eq.s32.totalorder %s15, 0
      %p77 = por %p75, %p76
      %p78 = scmp.ne.s32.totalorder %s67, %s70
      %p79 = scmp.eq.s32.totalorder %s20, 1
      %p80 = por %p78, %p79
      %p81 = scmp.ne.s32.totalorder %s70, %s71
      %p82 = scmp.eq.s32.totalorder %s20, 0
      %p83 = por %p81, %p82
      %p84 = scmp.ne.s32.totalorder %s70, %s71
      %p85 = scmp.eq.s32.totalorder %s21, 1
      %p86 = por %p84, %p85
      %p88 = scmp.ne.s32.totalorder %s71, %s87
      %p89 = scmp.eq.s32.totalorder %s21, 0
      %p90 = por %p88, %p89
      %s91 = ssub.s32 %s22, %s34
      %s92 = ssub.s32 %s23, %s30
      %s93 = sor.u32 %s91, %s92
      %p94 = scmp.eq.s32.totalorder %s93, 0
      %s96 = sadd.s32 %s95, 1
      %s97 = scalar_select %p94, %s95, %s96
      %p100 = pneg %p94
      %p101 = scmp.eq.s32.totalorder %s15, 1
      %p102 = por %p100, %p101
      %p103 = scmp.ne.s32.totalorder %s95, %s98
      %p104 = scmp.eq.s32.totalorder %s15, 0
      %p105 = por %p103, %p104
      %p106 = scmp.ne.s32.totalorder %s95, %s98
      %p107 = scmp.eq.s32.totalorder %s20, 1
      %p108 = por %p106, %p107
      %p109 = scmp.ne.s32.totalorder %s98, %s99
      %p110 = scmp.eq.s32.totalorder %s20, 0
      %p111 = por %p109, %p110
      %p112 = scmp.ne.s32.totalorder %s98, %s99
      %p113 = scmp.eq.s32.totalorder %s21, 1
      %p114 = por %p112, %p113
      %p116 = scmp.ne.s32.totalorder %s99, %s115
      %p117 = scmp.eq.s32.totalorder %s21, 0
      %p118 = por %p116, %p117
      %s120 = sadd.s32 %s119, 1
      %p123 = scmp.eq.s32.totalorder %s15, 1
      %p124 = scmp.ne.s32.totalorder %s119, %s121
      %p125 = scmp.eq.s32.totalorder %s15, 0
      %p126 = por %p124, %p125
      %p127 = scmp.ne.s32.totalorder %s119, %s121
      %p128 = scmp.eq.s32.totalorder %s20, 1
      %p129 = por %p127, %p128
      %p130 = scmp.ne.s32.totalorder %s121, %s122
      %p131 = scmp.eq.s32.totalorder %s20, 0
      %p132 = por %p130, %p131
      %p133 = scmp.ne.s32.totalorder %s121, %s122
      %p134 = scmp.eq.s32.totalorder %s21, 1
      %p135 = por %p133, %p134
      %p137 = scmp.ne.s32.totalorder %s122, %s136
      %p138 = scmp.eq.s32.totalorder %s21, 0
      %p139 = por %p137, %p138
      %s141 = sadd.s32 %s140, 1
      %p144 = scmp.eq.s32.totalorder %s15, 1
      %p145 = scmp.ne.s32.totalorder %s140, %s142
      %p146 = scmp.eq.s32.totalorder %s15, 0
      %p147 = por %p145, %p146
      %p148 = scmp.ne.s32.totalorder %s140, %s142
      %p149 = scmp.eq.s32.totalorder %s20, 1
      %p150 = por %p148, %p149
      %p151 = scmp.ne.s32.totalorder %s142, %s143
      %p152 = scmp.eq.s32.totalorder %s20, 0
      %p153 = por %p151, %p152
      %p154 = scmp.ne.s32.totalorder %s142, %s143
      %p155 = scmp.eq.s32.totalorder %s21, 1
      %p156 = por %p154, %p155
      %p158 = scmp.ne.s32.totalorder %s143, %s157
      %p159 = scmp.eq.s32.totalorder %s21, 0
      %p160 = por %p158, %p159
      %s161 = ssub.s32 %s22, %s34
      %s162 = ssub.s32 %s23, %s30
      %s163 = sor.u32 %s161, %s162
      %p164 = scmp.eq.s32.totalorder %s163, 0
      %s166 = sadd.s32 %s165, 1
      %s167 = scalar_select %p164, %s165, %s166
      %p170 = pneg %p164
      %p171 = scmp.eq.s32.totalorder %s15, 1
      %p172 = por %p170, %p171
      %p173 = scmp.ne.s32.totalorder %s165, %s168
      %p174 = scmp.eq.s32.totalorder %s15, 0
      %p175 = por %p173, %p174
      %p176 = scmp.ne.s32.totalorder %s165, %s168
      %p177 = scmp.eq.s32.totalorder %s20, 1
      %p178 = por %p176, %p177
      %p179 = scmp.ne.s32.totalorder %s168, %s169
      %p180 = scmp.eq.s32.totalorder %s20, 0
      %p181 = por %p179, %p180
      %p182 = scmp.ne.s32.totalorder %s168, %s169
      %p183 = scmp.eq.s32.totalorder %s21, 1
      %p184 = por %p182, %p183
      %p186 = scmp.ne.s32.totalorder %s169, %s185
      %p187 = scmp.eq.s32.totalorder %s21, 0
      %p188 = por %p186, %p187
      %s189 = ssub.s32 %s22, %s34
      %p190 = scmp.eq.s32.totalorder %s189, 0
      %s192 = sadd.s32 %s191, 1
      %s193 = scalar_select %p190, %s191, %s192
      %p196 = pneg %p190
      %p197 = scmp.eq.s32.totalorder %s15, 1
      %p198 = por %p196, %p197
      %p199 = scmp.ne.s32.totalorder %s191, %s194
      %p200 = scmp.eq.s32.totalorder %s15, 0
      %p201 = por %p199, %p200
      %p202 = scmp.ne.s32.totalorder %s191, %s194
      %p203 = scmp.eq.s32.totalorder %s20, 1
      %p204 = por %p202, %p203
      %p205 = scmp.ne.s32.totalorder %s194, %s195
      %p206 = scmp.eq.s32.totalorder %s20, 0
      %p207 = por %p205, %p206
      %p208 = scmp.ne.s32.totalorder %s194, %s195
      %p209 = scmp.eq.s32.totalorder %s21, 1
      %p210 = por %p208, %p209
      %p212 = scmp.ne.s32.totalorder %s195, %s211
      %p213 = scmp.eq.s32.totalorder %s21, 0
      %p214 = por %p212, %p213
      %p215 = scmp.le.s32.totalorder 1, %s15
      %p216 = scmp.lt.s32.totalorder %s15, 3
      %p217 = pnand %p215, %p216
      %p218 = pneg %p217
      // Predicated region
      $region9: #{finetune_forward.1} parent=5 // pred_check
        _
      $region10: #{finetune_forward.1} parent=5 // pred_check_branch
        %220 = sbr.rel (%p217) target = $region12
      $region11: #{finetune_forward.1} parent=5 // pred_region
        %s221 = ssub.s32 %s15, 1
        // Predicated region
        $region13: #{finetune_forward.1} parent=11 // pred_check
          %p222 = pneg %p132
        $region14: #{finetune_forward.1} parent=11 // pred_check_branch
          %224 = sbr.rel (%p222) target = $region16
        $region15: #{finetune_forward.1} parent=11 // pred_region
          %s226 = ssub.s32 64, 64
          %227 = vsyncadd [#allocation3], %s226
          %s229 = sshll.u32 %s3, 4
          %s230 = int_to_ptr.vmem [resolvable:$true] %s229
          %232 = dma.vmem_to_smem %s230, 64, [#allocation2], [#allocation3]
        $region16: #{finetune_forward.1} parent=11 // pred_fallthru
          _
        // Predicated region
        $region17: #{finetune_forward.1} parent=11 // pred_check
          %p233 = pneg %p153
        $region18: #{finetune_forward.1} parent=11 // pred_check_branch
          %235 = sbr.rel (%p233) target = $region20
        $region19: #{finetune_forward.1} parent=11 // pred_region
          %s237 = ssub.s32 16, 16
          %238 = vsyncadd [#allocation5], %s237
          %s240 = sshll.u32 %s4, 4
          %s241 = int_to_ptr.vmem [resolvable:$true] %s240
          %243 = dma.vmem_to_smem %s241, 16, [#allocation4], [#allocation5]
        $region20: #{finetune_forward.1} parent=11 // pred_fallthru
          _
      $region12: #{finetune_forward.1} parent=5 // pred_fallthru
        _
      %p244 = scmp.lt.s32.totalorder %s15, 2
      // Predicated region
      $region21: #{finetune_forward.1} parent=5 // pred_check
        %p245 = pneg %p244
      $region22: #{finetune_forward.1} parent=5 // pred_check_branch
        %247 = sbr.rel (%p245) target = $region24
      $region23: #{finetune_forward.1} parent=5 // pred_region
        // Predicated region
        $region25: #{finetune_forward.1} parent=23 // pred_check
          %p248 = pneg %p49
        $region26: #{finetune_forward.1} parent=23 // pred_check_branch
          %250 = sbr.rel (%p248) target = $region28
        $region27: #{finetune_forward.1} parent=23 // pred_region
          %p251 = scmp.lt.s32.totalorder %s22, 1
          %s252 = scalar_select %p251, %s22, 1
          %p253 = scmp.lt.s32.totalorder %s23, 0
          %s254 = scalar_select %p253, %s23, 0
          %s255 = smul.addr %s252, 4
          %s256 = sadd.s32 %s254, %s255
          %s257 = smul.addr %s256, 2
          %s258 = scalar_lea.vmem %s0, %s257
        $region28: #{finetune_forward.1} parent=23 // pred_fallthru
          _
        // Predicated region
        $region29: #{finetune_forward.1} parent=23 // pred_check
          %p259 = pneg %p77
        $region30: #{finetune_forward.1} parent=23 // pred_check_branch
          %261 = sbr.rel (%p259) target = $region32
        $region31: #{finetune_forward.1} parent=23 // pred_region
          %p262 = scmp.lt.s32.totalorder %s22, 1
          %s263 = scalar_select %p262, %s22, 1
          %p264 = scmp.lt.s32.totalorder %s23, 0
          %s265 = scalar_select %p264, %s23, 0
          %s266 = smul.addr %s263, 4
          %s267 = sadd.s32 %s265, %s266
          %s268 = smul.addr %s267, 2
          %s269 = scalar_lea.vmem %s1, %s268
        $region32: #{finetune_forward.1} parent=23 // pred_fallthru
          _
        // Predicated region
        $region33: #{finetune_forward.1} parent=23 // pred_check
          %p270 = pneg %p105
        $region34: #{finetune_forward.1} parent=23 // pred_check_branch
          %272 = sbr.rel (%p270) target = $region36
        $region35: #{finetune_forward.1} parent=23 // pred_region
          %p273 = scmp.lt.s32.totalorder %s22, 1
          %s274 = scalar_select %p273, %s22, 1
          %p275 = scmp.lt.s32.totalorder %s23, 0
          %s276 = scalar_select %p275, %s23, 0
          %s277 = smul.addr %s274, 4
          %s278 = sadd.s32 %s276, %s277
          %s279 = smul.addr %s278, 2
          %s280 = scalar_lea.vmem %s2, %s279
        $region36: #{finetune_forward.1} parent=23 // pred_fallthru
          _
      $region24: #{finetune_forward.1} parent=5 // pred_fallthru
        _
      %p281 = scmp.le.s32.totalorder 1, %s15
      %p282 = scmp.lt.s32.totalorder %s15, 3
      %p283 = pnand %p281, %p282
      %p284 = pneg %p283
      // Predicated region
      $region37: #{finetune_forward.1} parent=5 // pred_check
        _
      $region38: #{finetune_forward.1} parent=5 // pred_check_branch
        %286 = sbr.rel (%p283) target = $region40
      $region39: #{finetune_forward.1} parent=5 // pred_region
        %s287 = ssub.s32 %s15, 1
        // Predicated region
        $region41: #{finetune_forward.1} parent=39 // pred_check
          %p288 = pneg %p132
        $region42: #{finetune_forward.1} parent=39 // pred_check_branch
          %290 = sbr.rel (%p288) target = $region44
        $region43: #{finetune_forward.1} parent=39 // pred_region
          %291 = dma.done [#allocation3], 64
        $region44: #{finetune_forward.1} parent=39 // pred_fallthru
          _
        // Predicated region
        $region45: #{finetune_forward.1} parent=39 // pred_check
          %p292 = pneg %p153
        $region46: #{finetune_forward.1} parent=39 // pred_check_branch
          %294 = sbr.rel (%p292) target = $region48
        $region47: #{finetune_forward.1} parent=39 // pred_region
          %295 = dma.done [#allocation5], 16
        $region48: #{finetune_forward.1} parent=39 // pred_fallthru
          _
        %296 = sfence
        %p297 = scmp.lt.s32.totalorder %s24, 1
        %s298 = scalar_select %p297, %s24, 1
        %p299 = scmp.lt.s32.totalorder %s25, 0
        %s300 = scalar_select %p299, %s25, 0
        %s301 = smul.addr %s298, 4
        %s302 = sadd.s32 %s300, %s301
        %s303 = smul.addr %s302, 2
        %s304 = scalar_lea.vmem %s0, %s303
        %p305 = pneg %p55
        %p306 = pneg %p52
        %p307 = scmp.lt.s32.totalorder %s24, 1
        %s308 = scalar_select %p307, %s24, 1
        %p309 = scmp.lt.s32.totalorder %s25, 0
        %s310 = scalar_select %p309, %s25, 0
        %s311 = smul.addr %s308, 4
        %s312 = sadd.s32 %s310, %s311
        %s313 = smul.addr %s312, 2
        %s314 = scalar_lea.vmem %s1, %s313
        %p315 = pneg %p83
        %p316 = pneg %p80
        %p317 = scmp.lt.s32.totalorder %s24, 1
        %s318 = scalar_select %p317, %s24, 1
        %p319 = scmp.lt.s32.totalorder %s25, 0
        %s320 = scalar_select %p319, %s25, 0
        %s321 = smul.addr %s318, 4
        %s322 = sadd.s32 %s320, %s321
        %s323 = smul.addr %s322, 2
        %s324 = scalar_lea.vmem %s2, %s323
        %p325 = pneg %p111
        %p326 = pneg %p108
        %p327 = pneg %p132
        %p328 = pneg %p129
        %p329 = pneg %p153
        %p330 = pneg %p150
        %p331 = pneg %p181
        %p332 = pneg %p178
        %p333 = scmp.lt.s32.totalorder %s24, 1
        %s334 = scalar_select %p333, %s24, 1
        %p335 = scmp.lt.s32.totalorder %s25, 0
        %s336 = scalar_select %p335, %s25, 0
        %s337 = smul.addr %s334, 4
        %s338 = sadd.s32 %s336, %s337
        %s339 = smul.addr %s338, 2
        %s340 = scalar_lea.vmem %s5, %s339
        %p341 = pneg %p207
        %p342 = pneg %p204
        %p343 = scmp.lt.s32.totalorder %s24, 1
        %s344 = scalar_select %p343, %s24, 1
        %s345 = smul.addr %s344, 2
        %s346 = smul.addr %s345, 4
        %s347 = scalar_lea.vmem %s6, %s346
        %p348 = scmp.lt.s32.totalorder %s24, 1
        %s349 = scalar_select %p348, %s24, 1
        %p350 = scmp.lt.s32.totalorder %s25, 0
        %s351 = scalar_select %p350, %s25, 0
        %s352 = smul.addr %s349, 4
        %s353 = sadd.s32 %s351, %s352
        %s354 = smul.addr %s353, 2
        %s355 = scalar_lea.vmem %s0, %s354
        %p356 = scmp.lt.s32.totalorder %s24, 1
        %s357 = scalar_select %p356, %s24, 1
        %p358 = scmp.lt.s32.totalorder %s25, 0
        %s359 = scalar_select %p358, %s25, 0
        %s360 = smul.addr %s357, 4
        %s361 = sadd.s32 %s359, %s360
        %s362 = smul.addr %s361, 2
        %s363 = scalar_lea.vmem %s1, %s362
        %p364 = scmp.lt.s32.totalorder %s24, 1
        %s365 = scalar_select %p364, %s24, 1
        %p366 = scmp.lt.s32.totalorder %s25, 0
        %s367 = scalar_select %p366, %s25, 0
        %s368 = smul.addr %s365, 4
        %s369 = sadd.s32 %s367, %s368
        %s370 = smul.addr %s369, 2
        %s371 = scalar_lea.vmem %s2, %s370
        %p372 = scmp.lt.s32.totalorder %s24, 1
        %s373 = scalar_select %p372, %s24, 1
        %p374 = scmp.lt.s32.totalorder %s25, 0
        %s375 = scalar_select %p374, %s25, 0
        %s376 = smul.addr %s373, 4
        %s377 = sadd.s32 %s375, %s376
        %s378 = smul.addr %s377, 2
        %s379 = scalar_lea.vmem %s5, %s378
        %p380 = scmp.lt.s32.totalorder %s24, 1
        %s381 = scalar_select %p380, %s24, 1
        %s382 = smul.addr %s381, 2
        %s383 = smul.addr %s382, 4
        %s384 = scalar_lea.vmem %s6, %s383
        %p385 = scmp.eq.s32.totalorder %s25, 0
        // Predicated region
        $region49: #{finetune_forward.1} parent=39 // pred_check
          %p386 = pneg %p385
        $region50: #{finetune_forward.1} parent=39 // pred_check_branch
          %388 = sbr.rel (%p386) target = $region52
        $region51: #{finetune_forward.1} parent=39 // pred_region
          %vm389 = vcmask 60416
          %390 = vst.msk [vmem:[%s384] sm:$0xf] %vm389, 0.0
          %391 = vst.msk [vmem:[%s384 + $0x4] sm:$0xf] %vm389, 0.0
        $region52: #{finetune_forward.1} parent=39 // pred_fallthru
          _
        %v392 = vld [vmem:[%s355] sm:$0x3]
        %v393 = vld [vmem:[%s355 + $0x2] sm:$0x3]
        %v394 = vld [vmem:[%s355 + $0x4] sm:$0x3]
        %v395 = vld [vmem:[%s355 + $0x6] sm:$0x3]
        %v396 = vld [vmem:[%s363] sm:$0x3]
        %v397 = vld [vmem:[%s363 + $0x2] sm:$0x3]
        %v398 = vld [vmem:[%s363 + $0x4] sm:$0x3]
        %v399 = vld [vmem:[%s363 + $0x6] sm:$0x3]
        %v400 = vld [vmem:[%s371] sm:$0x3]
        %v401 = vld [vmem:[%s371 + $0x2] sm:$0x3]
        %v402 = vld [vmem:[%s371 + $0x4] sm:$0x3]
        %v403 = vld [vmem:[%s371 + $0x6] sm:$0x3]
        %s404 = sld [smem:[#allocation2]]
        %v405 = vstv %s404
        %v406 = vmul.f32 %v392, %v405
        %s407 = sld [smem:[#allocation2 + $0x1]]
        %v408 = vstv %s407
        %v409 = vmul.f32 %v393, %v408
        %v410 = vadd.f32 %v406, %v409
        %s411 = sld [smem:[#allocation2 + $0x2]]
        %v412 = vstv %s411
        %v413 = vmul.f32 %v394, %v412
        %v414 = vadd.f32 %v410, %v413
        %s415 = sld [smem:[#allocation2 + $0x3]]
        %v416 = vstv %s415
        %v417 = vmul.f32 %v395, %v416
        %v418 = vadd.f32 %v414, %v417
        %s419 = sld [smem:[#allocation4]]
        %v420 = vstv %s419
        %v421 = vadd.f32 %v418, %v420
        %s422 = sld [smem:[#allocation2 + $0x80]]
        %v423 = vstv %s422
        %v424 = vmul.f32 %v392, %v423
        %s425 = sld [smem:[#allocation2 + $0x81]]
        %v426 = vstv %s425
        %v427 = vmul.f32 %v393, %v426
        %v428 = vadd.f32 %v424, %v427
        %s429 = sld [smem:[#allocation2 + $0x82]]
        %v430 = vstv %s429
        %v431 = vmul.f32 %v394, %v430
        %v432 = vadd.f32 %v428, %v431
        %s433 = sld [smem:[#allocation2 + $0x83]]
        %v434 = vstv %s433
        %v435 = vmul.f32 %v395, %v434
        %v436 = vadd.f32 %v432, %v435
        %s437 = sld [smem:[#allocation4 + $0x1]]
        %v438 = vstv %s437
        %v439 = vadd.f32 %v436, %v438
        %s440 = sld [smem:[#allocation2 + $0x100]]
        %v441 = vstv %s440
        %v442 = vmul.f32 %v392, %v441
        %s443 = sld [smem:[#allocation2 + $0x101]]
        %v444 = vstv %s443
        %v445 = vmul.f32 %v393, %v444
        %v446 = vadd.f32 %v442, %v445
        %s447 = sld [smem:[#allocation2 + $0x102]]
        %v448 = vstv %s447
        %v449 = vmul.f32 %v394, %v448
        %v450 = vadd.f32 %v446, %v449
        %s451 = sld [smem:[#allocation2 + $0x103]]
        %v452 = vstv %s451
        %v453 = vmul.f32 %v395, %v452
        %v454 = vadd.f32 %v450, %v453
        %s455 = sld [smem:[#allocation4 + $0x2]]
        %v456 = vstv %s455
        %v457 = vadd.f32 %v454, %v456
        %s458 = sld [smem:[#allocation2 + $0x180]]
        %v459 = vstv %s458
        %v460 = vmul.f32 %v392, %v459
        %s461 = sld [smem:[#allocation2 + $0x181]]
        %v462 = vstv %s461
        %v463 = vmul.f32 %v393, %v462
        %v464 = vadd.f32 %v460, %v463
        %s465 = sld [smem:[#allocation2 + $0x182]]
        %v466 = vstv %s465
        %v467 = vmul.f32 %v394, %v466
        %v468 = vadd.f32 %v464, %v467
        %s469 = sld [smem:[#allocation2 + $0x183]]
        %v470 = vstv %s469
        %v471 = vmul.f32 %v395, %v470
        %v472 = vadd.f32 %v468, %v471
        %s473 = sld [smem:[#allocation4 + $0x3]]
        %v474 = vstv %s473
        %v475 = vadd.f32 %v472, %v474
        %476 = vst [vmem:[%s379] sm:$0x3] %v421
        %477 = vst [vmem:[%s379 + $0x2] sm:$0x3] %v439
        %478 = vst [vmem:[%s379 + $0x4] sm:$0x3] %v457
        %479 = vst [vmem:[%s379 + $0x6] sm:$0x3] %v475
        %v480 = vld [vmem:[%s384] sm:$0xf]
        %v481 = vsub.f32 %v421, %v396
        %v482 = vsub.f32 %v439, %v397
        %v483 = vsub.f32 %v457, %v398
        %v484 = vsub.f32 %v475, %v399
        %v485 = vand.u32 2147483647, %v481
        %v486 = vand.u32 2147483647, %v482
        %v487 = vand.u32 2147483647, %v483
        %v488 = vand.u32 2147483647, %v484
        %vm489 = vcmask 1041408
        %v490 = vsel %vm489, %v485, 0.0
        %v491 = vrot.slane %v490, 4
        %v492 = vadd.f32 %v490, %v491
        %v493 = vrot.slane %v492, 2
        %v494 = vadd.f32 %v492, %v493
        %v495 = vrot.slane %v494, 1
        %v496 = vadd.f32 %v494, %v495
        %v497 = vsel %vm489, %v486, 0.0
        %v498 = vrot.slane %v497, 4
        %v499 = vadd.f32 %v497, %v498
        %v500 = vrot.slane %v499, 2
        %v501 = vadd.f32 %v499, %v500
        %v502 = vrot.slane %v501, 1
        %v503 = vadd.f32 %v501, %v502
        %v504 = vsel %vm489, %v487, 0.0
        %v505 = vrot.slane %v504, 4
        %v506 = vadd.f32 %v504, %v505
        %v507 = vrot.slane %v506, 2
        %v508 = vadd.f32 %v506, %v507
        %v509 = vrot.slane %v508, 1
        %v510 = vadd.f32 %v508, %v509
        %v511 = vsel %vm489, %v488, 0.0
        %v512 = vrot.slane %v511, 4
        %v513 = vadd.f32 %v511, %v512
        %v514 = vrot.slane %v513, 2
        %v515 = vadd.f32 %v513, %v514
        %v516 = vrot.slane %v515, 1
        %v517 = vadd.f32 %v515, %v516
        %vm522 = vcmask 1041409
        %v523 = vsel %vm522, %v503, %v496
        %vm524 = vcmask 1042434
        %v525 = vsel %vm524, %v510, %v523
        %vm526 = vcmask 1043459
        %v527 = vsel %vm526, %v517, %v525
        %vm529 = vcmask 1043456
        %v530 = vsel %vm529, %v527, 0.0
        %531 = vadd.xlane.f32.xlu0 %v530
        %v532 = vpop.xlane.xlu0 %531
        %v533 = vmul.f32 %v481, %v481
        %v534 = vmul.f32 %v482, %v482
        %v535 = vmul.f32 %v483, %v483
        %v536 = vmul.f32 %v484, %v484
        %v537 = vsel %vm489, %v533, 0.0
        %v538 = vrot.slane %v537, 4
        %v539 = vadd.f32 %v537, %v538
        %v540 = vrot.slane %v539, 2
        %v541 = vadd.f32 %v539, %v540
        %v542 = vrot.slane %v541, 1
        %v543 = vadd.f32 %v541, %v542
        %v544 = vsel %vm489, %v534, 0.0
        %v545 = vrot.slane %v544, 4
        %v546 = vadd.f32 %v544, %v545
        %v547 = vrot.slane %v546, 2
        %v548 = vadd.f32 %v546, %v547
        %v549 = vrot.slane %v548, 1
        %v550 = vadd.f32 %v548, %v549
        %v551 = vsel %vm489, %v535, 0.0
        %v552 = vrot.slane %v551, 4
        %v553 = vadd.f32 %v551, %v552
        %v554 = vrot.slane %v553, 2
        %v555 = vadd.f32 %v553, %v554
        %v556 = vrot.slane %v555, 1
        %v557 = vadd.f32 %v555, %v556
        %v558 = vsel %vm489, %v536, 0.0
        %v559 = vrot.slane %v558, 4
        %v560 = vadd.f32 %v558, %v559
        %v561 = vrot.slane %v560, 2
        %v562 = vadd.f32 %v560, %v561
        %v563 = vrot.slane %v562, 1
        %v564 = vadd.f32 %v562, %v563
        %v569 = vsel %vm522, %v550, %v543
        %v570 = vsel %vm524, %v557, %v569
        %v571 = vsel %vm526, %v564, %v570
        %v573 = vsel %vm529, %v571, 0.0
        %574 = vadd.xlane.f32.xlu0 %v573
        %v575 = vpop.xlane.xlu0 %574
        %v576 = vsel %vm489, %v421, 0.0
        %v577 = vrot.slane %v576, 4
        %v578 = vadd.f32 %v576, %v577
        %v579 = vrot.slane %v578, 2
        %v580 = vadd.f32 %v578, %v579
        %v581 = vrot.slane %v580, 1
        %v582 = vadd.f32 %v580, %v581
        %v583 = vsel %vm489, %v439, 0.0
        %v584 = vrot.slane %v583, 4
        %v585 = vadd.f32 %v583, %v584
        %v586 = vrot.slane %v585, 2
        %v587 = vadd.f32 %v585, %v586
        %v588 = vrot.slane %v587, 1
        %v589 = vadd.f32 %v587, %v588
        %v590 = vsel %vm489, %v457, 0.0
        %v591 = vrot.slane %v590, 4
        %v592 = vadd.f32 %v590, %v591
        %v593 = vrot.slane %v592, 2
        %v594 = vadd.f32 %v592, %v593
        %v595 = vrot.slane %v594, 1
        %v596 = vadd.f32 %v594, %v595
        %v597 = vsel %vm489, %v475, 0.0
        %v598 = vrot.slane %v597, 4
        %v599 = vadd.f32 %v597, %v598
        %v600 = vrot.slane %v599, 2
        %v601 = vadd.f32 %v599, %v600
        %v602 = vrot.slane %v601, 1
        %v603 = vadd.f32 %v601, %v602
        %v608 = vsel %vm522, %v589, %v582
        %v609 = vsel %vm524, %v596, %v608
        %v610 = vsel %vm526, %v603, %v609
        %v612 = vsel %vm529, %v610, 0.0
        %613 = vadd.xlane.f32.xlu0 %v612
        %v614 = vpop.xlane.xlu0 %613
        %v615 = vsel %vm489, %v396, 0.0
        %v616 = vrot.slane %v615, 4
        %v617 = vadd.f32 %v615, %v616
        %v618 = vrot.slane %v617, 2
        %v619 = vadd.f32 %v617, %v618
        %v620 = vrot.slane %v619, 1
        %v621 = vadd.f32 %v619, %v620
        %v622 = vsel %vm489, %v397, 0.0
        %v623 = vrot.slane %v622, 4
        %v624 = vadd.f32 %v622, %v623
        %v625 = vrot.slane %v624, 2
        %v626 = vadd.f32 %v624, %v625
        %v627 = vrot.slane %v626, 1
        %v628 = vadd.f32 %v626, %v627
        %v629 = vsel %vm489, %v398, 0.0
        %v630 = vrot.slane %v629, 4
        %v631 = vadd.f32 %v629, %v630
        %v632 = vrot.slane %v631, 2
        %v633 = vadd.f32 %v631, %v632
        %v634 = vrot.slane %v633, 1
        %v635 = vadd.f32 %v633, %v634
        %v636 = vsel %vm489, %v399, 0.0
        %v637 = vrot.slane %v636, 4
        %v638 = vadd.f32 %v636, %v637
        %v639 = vrot.slane %v638, 2
        %v640 = vadd.f32 %v638, %v639
        %v641 = vrot.slane %v640, 1
        %v642 = vadd.f32 %v640, %v641
        %v647 = vsel %vm522, %v628, %v621
        %v648 = vsel %vm524, %v635, %v647
        %v649 = vsel %vm526, %v642, %v648
        %v651 = vsel %vm529, %v649, 0.0
        %652 = vadd.xlane.f32.xlu0 %v651
        %v653 = vpop.xlane.xlu0 %652
        %v654 = vmul.f32 %v421, %v421
        %v655 = vmul.f32 %v439, %v439
        %v656 = vmul.f32 %v457, %v457
        %v657 = vmul.f32 %v475, %v475
        %v658 = vsel %vm489, %v654, 0.0
        %v659 = vrot.slane %v658, 4
        %v660 = vadd.f32 %v658, %v659
        %v661 = vrot.slane %v660, 2
        %v662 = vadd.f32 %v660, %v661
        %v663 = vrot.slane %v662, 1
        %v664 = vadd.f32 %v662, %v663
        %v665 = vsel %vm489, %v655, 0.0
        %v666 = vrot.slane %v665, 4
        %v667 = vadd.f32 %v665, %v666
        %v668 = vrot.slane %v667, 2
        %v669 = vadd.f32 %v667, %v668
        %v670 = vrot.slane %v669, 1
        %v671 = vadd.f32 %v669, %v670
        %v672 = vsel %vm489, %v656, 0.0
        %v673 = vrot.slane %v672, 4
        %v674 = vadd.f32 %v672, %v673
        %v675 = vrot.slane %v674, 2
        %v676 = vadd.f32 %v674, %v675
        %v677 = vrot.slane %v676, 1
        %v678 = vadd.f32 %v676, %v677
        %v679 = vsel %vm489, %v657, 0.0
        %v680 = vrot.slane %v679, 4
        %v681 = vadd.f32 %v679, %v680
        %v682 = vrot.slane %v681, 2
        %v683 = vadd.f32 %v681, %v682
        %v684 = vrot.slane %v683, 1
        %v685 = vadd.f32 %v683, %v684
        %v690 = vsel %vm522, %v671, %v664
        %v691 = vsel %vm524, %v678, %v690
        %v692 = vsel %vm526, %v685, %v691
        %v694 = vsel %vm529, %v692, 0.0
        %695 = vadd.xlane.f32.xlu0 %v694
        %v696 = vpop.xlane.xlu0 %695
        %v697 = vmul.f32 %v396, %v396
        %v698 = vmul.f32 %v397, %v397
        %v699 = vmul.f32 %v398, %v398
        %v700 = vmul.f32 %v399, %v399
        %v701 = vsel %vm489, %v697, 0.0
        %v702 = vrot.slane %v701, 4
        %v703 = vadd.f32 %v701, %v702
        %v704 = vrot.slane %v703, 2
        %v705 = vadd.f32 %v703, %v704
        %v706 = vrot.slane %v705, 1
        %v707 = vadd.f32 %v705, %v706
        %v708 = vsel %vm489, %v698, 0.0
        %v709 = vrot.slane %v708, 4
        %v710 = vadd.f32 %v708, %v709
        %v711 = vrot.slane %v710, 2
        %v712 = vadd.f32 %v710, %v711
        %v713 = vrot.slane %v712, 1
        %v714 = vadd.f32 %v712, %v713
        %v715 = vsel %vm489, %v699, 0.0
        %v716 = vrot.slane %v715, 4
        %v717 = vadd.f32 %v715, %v716
        %v718 = vrot.slane %v717, 2
        %v719 = vadd.f32 %v717, %v718
        %v720 = vrot.slane %v719, 1
        %v721 = vadd.f32 %v719, %v720
        %v722 = vsel %vm489, %v700, 0.0
        %v723 = vrot.slane %v722, 4
        %v724 = vadd.f32 %v722, %v723
        %v725 = vrot.slane %v724, 2
        %v726 = vadd.f32 %v724, %v725
        %v727 = vrot.slane %v726, 1
        %v728 = vadd.f32 %v726, %v727
        %v733 = vsel %vm522, %v714, %v707
        %v734 = vsel %vm524, %v721, %v733
        %v735 = vsel %vm526, %v728, %v734
        %v737 = vsel %vm529, %v735, 0.0
        %738 = vadd.xlane.f32.xlu0 %v737
        %v739 = vpop.xlane.xlu0 %738
        %v740 = vmul.f32 %v421, %v396
        %v741 = vmul.f32 %v439, %v397
        %v742 = vmul.f32 %v457, %v398
        %v743 = vmul.f32 %v475, %v399
        %v744 = vsel %vm489, %v740, 0.0
        %v745 = vrot.slane %v744, 4
        %v746 = vadd.f32 %v744, %v745
        %v747 = vrot.slane %v746, 2
        %v748 = vadd.f32 %v746, %v747
        %v749 = vrot.slane %v748, 1
        %v750 = vadd.f32 %v748, %v749
        %v751 = vsel %vm489, %v741, 0.0
        %v752 = vrot.slane %v751, 4
        %v753 = vadd.f32 %v751, %v752
        %v754 = vrot.slane %v753, 2
        %v755 = vadd.f32 %v753, %v754
        %v756 = vrot.slane %v755, 1
        %v757 = vadd.f32 %v755, %v756
        %v758 = vsel %vm489, %v742, 0.0
        %v759 = vrot.slane %v758, 4
        %v760 = vadd.f32 %v758, %v759
        %v761 = vrot.slane %v760, 2
        %v762 = vadd.f32 %v760, %v761
        %v763 = vrot.slane %v762, 1
        %v764 = vadd.f32 %v762, %v763
        %v765 = vsel %vm489, %v743, 0.0
        %v766 = vrot.slane %v765, 4
        %v767 = vadd.f32 %v765, %v766
        %v768 = vrot.slane %v767, 2
        %v769 = vadd.f32 %v767, %v768
        %v770 = vrot.slane %v769, 1
        %v771 = vadd.f32 %v769, %v770
        %v776 = vsel %vm522, %v757, %v750
        %v777 = vsel %vm524, %v764, %v776
        %v778 = vsel %vm526, %v771, %v777
        %v780 = vsel %vm529, %v778, 0.0
        %781 = vadd.xlane.f32.xlu0 %v780
        %v782 = vpop.xlane.xlu0 %781
        %vm783 = vcmask 7168
        %v784 = vsel %vm783, %v532, %v575
        %vm785 = vcmask 15360
        %v786 = vsel %vm785, %v784, %v614
        %vm787 = vcmask 23552
        %v788 = vsel %vm787, %v786, %v653
        %vm789 = vcmask 31744
        %v790 = vsel %vm789, %v788, %v696
        %vm791 = vcmask 39936
        %v792 = vsel %vm791, %v790, %v739
        %vm793 = vcmask 48128
        %v794 = vsel %vm793, %v792, %v782
        %vm795 = vcmask 56320
        %v796 = vsel %vm795, %v794, 0.0
        %v797 = vadd.f32 %v480, %v796
        %vm798 = vcmask 60416
        %799 = vst.msk [vmem:[%s384] sm:$0xf] %vm798, %v797
        %s800 = scalar_lea.vmem %s384, 4
        %v801 = vld [vmem:[%s800] sm:$0xf]
        %v802 = vsub.f32 %v392, %v400
        %v803 = vsub.f32 %v393, %v401
        %v804 = vsub.f32 %v394, %v402
        %v805 = vsub.f32 %v395, %v403
        %v806 = vand.u32 2147483647, %v802
        %v807 = vand.u32 2147483647, %v803
        %v808 = vand.u32 2147483647, %v804
        %v809 = vand.u32 2147483647, %v805
        %v810 = vsel %vm489, %v806, 0.0
        %v811 = vrot.slane %v810, 4
        %v812 = vadd.f32 %v810, %v811
        %v813 = vrot.slane %v812, 2
        %v814 = vadd.f32 %v812, %v813
        %v815 = vrot.slane %v814, 1
        %v816 = vadd.f32 %v814, %v815
        %v817 = vsel %vm489, %v807, 0.0
        %v818 = vrot.slane %v817, 4
        %v819 = vadd.f32 %v817, %v818
        %v820 = vrot.slane %v819, 2
        %v821 = vadd.f32 %v819, %v820
        %v822 = vrot.slane %v821, 1
        %v823 = vadd.f32 %v821, %v822
        %v824 = vsel %vm489, %v808, 0.0
        %v825 = vrot.slane %v824, 4
        %v826 = vadd.f32 %v824, %v825
        %v827 = vrot.slane %v826, 2
        %v828 = vadd.f32 %v826, %v827
        %v829 = vrot.slane %v828, 1
        %v830 = vadd.f32 %v828, %v829
        %v831 = vsel %vm489, %v809, 0.0
        %v832 = vrot.slane %v831, 4
        %v833 = vadd.f32 %v831, %v832
        %v834 = vrot.slane %v833, 2
        %v835 = vadd.f32 %v833, %v834
        %v836 = vrot.slane %v835, 1
        %v837 = vadd.f32 %v835, %v836
        %v842 = vsel %vm522, %v823, %v816
        %v843 = vsel %vm524, %v830, %v842
        %v844 = vsel %vm526, %v837, %v843
        %v846 = vsel %vm529, %v844, 0.0
        %847 = vadd.xlane.f32.xlu0 %v846
        %v848 = vpop.xlane.xlu0 %847
        %v849 = vmul.f32 %v802, %v802
        %v850 = vmul.f32 %v803, %v803
        %v851 = vmul.f32 %v804, %v804
        %v852 = vmul.f32 %v805, %v805
        %v853 = vsel %vm489, %v849, 0.0
        %v854 = vrot.slane %v853, 4
        %v855 = vadd.f32 %v853, %v854
        %v856 = vrot.slane %v855, 2
        %v857 = vadd.f32 %v855, %v856
        %v858 = vrot.slane %v857, 1
        %v859 = vadd.f32 %v857, %v858
        %v860 = vsel %vm489, %v850, 0.0
        %v861 = vrot.slane %v860, 4
        %v862 = vadd.f32 %v860, %v861
        %v863 = vrot.slane %v862, 2
        %v864 = vadd.f32 %v862, %v863
        %v865 = vrot.slane %v864, 1
        %v866 = vadd.f32 %v864, %v865
        %v867 = vsel %vm489, %v851, 0.0
        %v868 = vrot.slane %v867, 4
        %v869 = vadd.f32 %v867, %v868
        %v870 = vrot.slane %v869, 2
        %v871 = vadd.f32 %v869, %v870
        %v872 = vrot.slane %v871, 1
        %v873 = vadd.f32 %v871, %v872
        %v874 = vsel %vm489, %v852, 0.0
        %v875 = vrot.slane %v874, 4
        %v876 = vadd.f32 %v874, %v875
        %v877 = vrot.slane %v876, 2
        %v878 = vadd.f32 %v876, %v877
        %v879 = vrot.slane %v878, 1
        %v880 = vadd.f32 %v878, %v879
        %v885 = vsel %vm522, %v866, %v859
        %v886 = vsel %vm524, %v873, %v885
        %v887 = vsel %vm526, %v880, %v886
        %v889 = vsel %vm529, %v887, 0.0
        %890 = vadd.xlane.f32.xlu0 %v889
        %v891 = vpop.xlane.xlu0 %890
        %v892 = vsel %vm489, %v392, 0.0
        %v893 = vrot.slane %v892, 4
        %v894 = vadd.f32 %v892, %v893
        %v895 = vrot.slane %v894, 2
        %v896 = vadd.f32 %v894, %v895
        %v897 = vrot.slane %v896, 1
        %v898 = vadd.f32 %v896, %v897
        %v899 = vsel %vm489, %v393, 0.0
        %v900 = vrot.slane %v899, 4
        %v901 = vadd.f32 %v899, %v900
        %v902 = vrot.slane %v901, 2
        %v903 = vadd.f32 %v901, %v902
        %v904 = vrot.slane %v903, 1
        %v905 = vadd.f32 %v903, %v904
        %v906 = vsel %vm489, %v394, 0.0
        %v907 = vrot.slane %v906, 4
        %v908 = vadd.f32 %v906, %v907
        %v909 = vrot.slane %v908, 2
        %v910 = vadd.f32 %v908, %v909
        %v911 = vrot.slane %v910, 1
        %v912 = vadd.f32 %v910, %v911
        %v913 = vsel %vm489, %v395, 0.0
        %v914 = vrot.slane %v913, 4
        %v915 = vadd.f32 %v913, %v914
        %v916 = vrot.slane %v915, 2
        %v917 = vadd.f32 %v915, %v916
        %v918 = vrot.slane %v917, 1
        %v919 = vadd.f32 %v917, %v918
        %v924 = vsel %vm522, %v905, %v898
        %v925 = vsel %vm524, %v912, %v924
        %v926 = vsel %vm526, %v919, %v925
        %v928 = vsel %vm529, %v926, 0.0
        %929 = vadd.xlane.f32.xlu0 %v928
        %v930 = vpop.xlane.xlu0 %929
        %v931 = vsel %vm489, %v400, 0.0
        %v932 = vrot.slane %v931, 4
        %v933 = vadd.f32 %v931, %v932
        %v934 = vrot.slane %v933, 2
        %v935 = vadd.f32 %v933, %v934
        %v936 = vrot.slane %v935, 1
        %v937 = vadd.f32 %v935, %v936
        %v938 = vsel %vm489, %v401, 0.0
        %v939 = vrot.slane %v938, 4
        %v940 = vadd.f32 %v938, %v939
        %v941 = vrot.slane %v940, 2
        %v942 = vadd.f32 %v940, %v941
        %v943 = vrot.slane %v942, 1
        %v944 = vadd.f32 %v942, %v943
        %v945 = vsel %vm489, %v402, 0.0
        %v946 = vrot.slane %v945, 4
        %v947 = vadd.f32 %v945, %v946
        %v948 = vrot.slane %v947, 2
        %v949 = vadd.f32 %v947, %v948
        %v950 = vrot.slane %v949, 1
        %v951 = vadd.f32 %v949, %v950
        %v952 = vsel %vm489, %v403, 0.0
        %v953 = vrot.slane %v952, 4
        %v954 = vadd.f32 %v952, %v953
        %v955 = vrot.slane %v954, 2
        %v956 = vadd.f32 %v954, %v955
        %v957 = vrot.slane %v956, 1
        %v958 = vadd.f32 %v956, %v957
        %v963 = vsel %vm522, %v944, %v937
        %v964 = vsel %vm524, %v951, %v963
        %v965 = vsel %vm526, %v958, %v964
        %v967 = vsel %vm529, %v965, 0.0
        %968 = vadd.xlane.f32.xlu0 %v967
        %v969 = vpop.xlane.xlu0 %968
        %v970 = vmul.f32 %v392, %v392
        %v971 = vmul.f32 %v393, %v393
        %v972 = vmul.f32 %v394, %v394
        %v973 = vmul.f32 %v395, %v395
        %v974 = vsel %vm489, %v970, 0.0
        %v975 = vrot.slane %v974, 4
        %v976 = vadd.f32 %v974, %v975
        %v977 = vrot.slane %v976, 2
        %v978 = vadd.f32 %v976, %v977
        %v979 = vrot.slane %v978, 1
        %v980 = vadd.f32 %v978, %v979
        %v981 = vsel %vm489, %v971, 0.0
        %v982 = vrot.slane %v981, 4
        %v983 = vadd.f32 %v981, %v982
        %v984 = vrot.slane %v983, 2
        %v985 = vadd.f32 %v983, %v984
        %v986 = vrot.slane %v985, 1
        %v987 = vadd.f32 %v985, %v986
        %v988 = vsel %vm489, %v972, 0.0
        %v989 = vrot.slane %v988, 4
        %v990 = vadd.f32 %v988, %v989
        %v991 = vrot.slane %v990, 2
        %v992 = vadd.f32 %v990, %v991
        %v993 = vrot.slane %v992, 1
        %v994 = vadd.f32 %v992, %v993
        %v995 = vsel %vm489, %v973, 0.0
        %v996 = vrot.slane %v995, 4
        %v997 = vadd.f32 %v995, %v996
        %v998 = vrot.slane %v997, 2
        %v999 = vadd.f32 %v997, %v998
        %v1000 = vrot.slane %v999, 1
        %v1001 = vadd.f32 %v999, %v1000
        %v1006 = vsel %vm522, %v987, %v980
        %v1007 = vsel %vm524, %v994, %v1006
        %v1008 = vsel %vm526, %v1001, %v1007
        %v1010 = vsel %vm529, %v1008, 0.0
        %1011 = vadd.xlane.f32.xlu0 %v1010
        %v1012 = vpop.xlane.xlu0 %1011
        %v1013 = vmul.f32 %v400, %v400
        %v1014 = vmul.f32 %v401, %v401
        %v1015 = vmul.f32 %v402, %v402
        %v1016 = vmul.f32 %v403, %v403
        %v1017 = vsel %vm489, %v1013, 0.0
        %v1018 = vrot.slane %v1017, 4
        %v1019 = vadd.f32 %v1017, %v1018
        %v1020 = vrot.slane %v1019, 2
        %v1021 = vadd.f32 %v1019, %v1020
        %v1022 = vrot.slane %v1021, 1
        %v1023 = vadd.f32 %v1021, %v1022
        %v1024 = vsel %vm489, %v1014, 0.0
        %v1025 = vrot.slane %v1024, 4
        %v1026 = vadd.f32 %v1024, %v1025
        %v1027 = vrot.slane %v1026, 2
        %v1028 = vadd.f32 %v1026, %v1027
        %v1029 = vrot.slane %v1028, 1
        %v1030 = vadd.f32 %v1028, %v1029
        %v1031 = vsel %vm489, %v1015, 0.0
        %v1032 = vrot.slane %v1031, 4
        %v1033 = vadd.f32 %v1031, %v1032
        %v1034 = vrot.slane %v1033, 2
        %v1035 = vadd.f32 %v1033, %v1034
        %v1036 = vrot.slane %v1035, 1
        %v1037 = vadd.f32 %v1035, %v1036
        %v1038 = vsel %vm489, %v1016, 0.0
        %v1039 = vrot.slane %v1038, 4
        %v1040 = vadd.f32 %v1038, %v1039
        %v1041 = vrot.slane %v1040, 2
        %v1042 = vadd.f32 %v1040, %v1041
        %v1043 = vrot.slane %v1042, 1
        %v1044 = vadd.f32 %v1042, %v1043
        %v1049 = vsel %vm522, %v1030, %v1023
        %v1050 = vsel %vm524, %v1037, %v1049
        %v1051 = vsel %vm526, %v1044, %v1050
        %v1053 = vsel %vm529, %v1051, 0.0
        %1054 = vadd.xlane.f32.xlu0 %v1053
        %v1055 = vpop.xlane.xlu0 %1054
        %v1056 = vmul.f32 %v392, %v400
        %v1057 = vmul.f32 %v393, %v401
        %v1058 = vmul.f32 %v394, %v402
        %v1059 = vmul.f32 %v395, %v403
        %v1060 = vsel %vm489, %v1056, 0.0
        %v1061 = vrot.slane %v1060, 4
        %v1062 = vadd.f32 %v1060, %v1061
        %v1063 = vrot.slane %v1062, 2
        %v1064 = vadd.f32 %v1062, %v1063
        %v1065 = vrot.slane %v1064, 1
        %v1066 = vadd.f32 %v1064, %v1065
        %v1067 = vsel %vm489, %v1057, 0.0
        %v1068 = vrot.slane %v1067, 4
        %v1069 = vadd.f32 %v1067, %v1068
        %v1070 = vrot.slane %v1069, 2
        %v1071 = vadd.f32 %v1069, %v1070
        %v1072 = vrot.slane %v1071, 1
        %v1073 = vadd.f32 %v1071, %v1072
        %v1074 = vsel %vm489, %v1058, 0.0
        %v1075 = vrot.slane %v1074, 4
        %v1076 = vadd.f32 %v1074, %v1075
        %v1077 = vrot.slane %v1076, 2
        %v1078 = vadd.f32 %v1076, %v1077
        %v1079 = vrot.slane %v1078, 1
        %v1080 = vadd.f32 %v1078, %v1079
        %v1081 = vsel %vm489, %v1059, 0.0
        %v1082 = vrot.slane %v1081, 4
        %v1083 = vadd.f32 %v1081, %v1082
        %v1084 = vrot.slane %v1083, 2
        %v1085 = vadd.f32 %v1083, %v1084
        %v1086 = vrot.slane %v1085, 1
        %v1087 = vadd.f32 %v1085, %v1086
        %v1092 = vsel %vm522, %v1073, %v1066
        %v1093 = vsel %vm524, %v1080, %v1092
        %v1094 = vsel %vm526, %v1087, %v1093
        %v1096 = vsel %vm529, %v1094, 0.0
        %1097 = vadd.xlane.f32.xlu0 %v1096
        %v1098 = vpop.xlane.xlu0 %1097
        %v1099 = vsel %vm783, %v848, %v891
        %v1100 = vsel %vm785, %v1099, %v930
        %v1101 = vsel %vm787, %v1100, %v969
        %v1102 = vsel %vm789, %v1101, %v1012
        %v1103 = vsel %vm791, %v1102, %v1055
        %v1104 = vsel %vm793, %v1103, %v1098
        %v1105 = vsel %vm795, %v1104, 0.0
        %v1106 = vadd.f32 %v801, %v1105
        %1107 = vst.msk [vmem:[%s800] sm:$0xf] %vm798, %v1106
        %p1108 = scmp.lt.s32.totalorder %s24, 1
        %s1109 = scalar_select %p1108, %s24, 1
        %p1110 = scmp.lt.s32.totalorder %s25, 0
        %s1111 = scalar_select %p1110, %s25, 0
        %s1112 = smul.addr %s1109, 4
        %s1113 = sadd.s32 %s1111, %s1112
        %s1114 = smul.addr %s1113, 2
        %s1115 = scalar_lea.vmem %s5, %s1114
        %p1116 = scmp.lt.s32.totalorder %s24, 1
        %s1117 = scalar_select %p1116, %s24, 1
        %s1118 = smul.addr %s1117, 2
        %s1119 = smul.addr %s1118, 4
        %s1120 = scalar_lea.vmem %s6, %s1119
        // Predicated region
        $region53: #{finetune_forward.1} parent=39 // pred_check
          %p1121 = pneg %p178
        $region54: #{finetune_forward.1} parent=39 // pred_check_branch
          %1123 = sbr.rel (%p1121) target = $region56
        $region55: #{finetune_forward.1} parent=39 // pred_region
          _
        $region56: #{finetune_forward.1} parent=39 // pred_fallthru
          _
        // Predicated region
        $region57: #{finetune_forward.1} parent=39 // pred_check
          %p1124 = pneg %p204
        $region58: #{finetune_forward.1} parent=39 // pred_check_branch
          %1126 = sbr.rel (%p1124) target = $region60
        $region59: #{finetune_forward.1} parent=39 // pred_region
          _
        $region60: #{finetune_forward.1} parent=39 // pred_fallthru
          _
      $region40: #{finetune_forward.1} parent=5 // pred_fallthru
        _
      %p1127 = scmp.le.s32.totalorder 2, %s15
      // Predicated region
      $region61: #{finetune_forward.1} parent=5 // pred_check
        %p1128 = pneg %p1127
      $region62: #{finetune_forward.1} parent=5 // pred_check_branch
        %1130 = sbr.rel (%p1128) target = $region64
      $region63: #{finetune_forward.1} parent=5 // pred_region
        %s1131 = ssub.s32 %s15, 2
        // Predicated region
        $region65: #{finetune_forward.1} parent=63 // pred_check
          %p1132 = pneg %p184
        $region66: #{finetune_forward.1} parent=63 // pred_check_branch
          %1134 = sbr.rel (%p1132) target = $region68
        $region67: #{finetune_forward.1} parent=63 // pred_region
          %p1135 = scmp.lt.s32.totalorder %s26, 1
          %s1136 = scalar_select %p1135, %s26, 1
          %p1137 = scmp.lt.s32.totalorder %s27, 0
          %s1138 = scalar_select %p1137, %s27, 0
          %s1139 = smul.addr %s1136, 4
          %s1140 = sadd.s32 %s1138, %s1139
          %s1141 = smul.addr %s1140, 2
          %s1142 = scalar_lea.vmem %s5, %s1141
        $region68: #{finetune_forward.1} parent=63 // pred_fallthru
          _
        // Predicated region
        $region69: #{finetune_forward.1} parent=63 // pred_check
          %p1143 = pneg %p210
        $region70: #{finetune_forward.1} parent=63 // pred_check_branch
          %1145 = sbr.rel (%p1143) target = $region72
        $region71: #{finetune_forward.1} parent=63 // pred_region
          %p1146 = scmp.lt.s32.totalorder %s26, 1
          %s1147 = scalar_select %p1146, %s26, 1
          %s1148 = smul.addr %s1147, 2
          %s1149 = smul.addr %s1148, 4
          %s1150 = scalar_lea.vmem %s6, %s1149
        $region72: #{finetune_forward.1} parent=63 // pred_fallthru
          _
      $region64: #{finetune_forward.1} parent=5 // pred_fallthru
        _
    $region6: #{finetune_forward.1} parent=1 // loop_footer
      %s19 = sadd.s32 1, %s15
    $region7: #{finetune_forward.1} parent=1 // loop_footer_branch
      %14 = sbr.rel target = $region3
    $region8: #{finetune_forward.1} parent=1 // loop_exit
      _
    %1151 = vsyncpa [#allocation3], 1
    %s1152 = scalar_lea.sflag [#allocation3], 1
    %1153 = vsyncpa %s1152, 1
    %1154 = vsyncpa [#allocation5], 1

</llo_original>
